<compile_context>
chip_gen: v7x
topology: tpu7x:2x2x1
jax: 0.10.0
libtpu: 0.0.40
codegen_flags: <defaults>
</compile_context>

<pallas_src>
import functools

import jax
import jax.numpy as jnp
from jax.experimental import pallas as pl
from jax.experimental.pallas import tpu as pltpu


def out_block_kernel(x_ref, w_ref, b_ref, o_ref, *, N, C, O):
    """Single invocation, no grid.

    x_ref: (N*C, HW) VMEM input, lane-dense (HW on lanes, batch*channel on sublanes)
    w_ref: (C*O,)    SMEM, w_ref[c*O + o] == ConvTranspose2d.weight[c, o, 0, 0]
    b_ref: (O,)      SMEM bias
    o_ref: (N*O, HW) VMEM output, lane-dense
    """
    # Load each input row once as a (1, HW) lane-dense slab (plain VMEM loads,
    # no XLU work).
    xrows = [x_ref[pl.ds(r, 1), :].astype(jnp.float32) for r in range(N * C)]

    rows = []
    for n in range(N):
        for o in range(O):
            # y[n, o, :] = b[o] + sum_c w[c, o] * x[n, c, :]  -- scalar*vector FMAs
            acc = xrows[n * C] * w_ref[o] + b_ref[o]
            for c in range(1, C):
                acc = acc + xrows[n * C + c] * w_ref[c * O + o]
            rows.append(acc)

    # Single lane-dense (N*O, HW) store.
    o_ref[...] = jnp.concatenate(rows, axis=0).astype(o_ref.dtype)


def out_block(x_nchw, weight, bias):
    """x_nchw: (N, C, H, W). weight: (C, O, 1, 1) ConvTranspose2d layout. bias: (O,)."""
    N, C, H, W = x_nchw.shape
    # weight.reshape below silently assumes a 1x1 kernel; make that assumption loud.
    assert weight.shape[0] == C and tuple(weight.shape[2:]) == (1, 1), (
        "OutBlock Pallas kernel only supports kernel_size=1 ConvTranspose")
    O = weight.shape[1]
    HW = H * W
    assert HW % 128 == 0, "H*W must be a multiple of 128 for unmasked lane-dense stores"

    x_flat = x_nchw.reshape(N * C, HW)        # free contiguous reshape, no transpose
    w_flat = weight.reshape(C * O)            # (C*O,) -> SMEM scalars
    b_flat = bias.reshape(O)                  # (O,)   -> SMEM scalars

    kernel = functools.partial(out_block_kernel, N=N, C=C, O=O)
    out_flat = pl.pallas_call(
        kernel,
        out_shape=jax.ShapeDtypeStruct((N * O, HW), x_nchw.dtype),
        in_specs=[
            pl.BlockSpec(memory_space=pltpu.MemorySpace.VMEM),   # x  (N*C, HW)
            pl.BlockSpec(memory_space=pltpu.MemorySpace.SMEM),   # weight scalars
            pl.BlockSpec(memory_space=pltpu.MemorySpace.SMEM),   # bias scalars
        ],
        out_specs=pl.BlockSpec(memory_space=pltpu.MemorySpace.VMEM),
    )(x_flat, w_flat, b_flat)

    return out_flat.reshape(N, O, H, W)       # free reshape back to NCHW


def reference_forward(x, weight, bias):
    """Pure-JAX mirror of OutBlock.forward (ConvTranspose2d, kernel_size=1)."""
    return (jnp.einsum("nchw,co->nohw", x, weight[:, :, 0, 0])
            + bias[None, :, None, None])


if __name__ == "__main__":
    # OutBlock(in_channels=4, n_classes=3, conv_op=nn.Conv2d) on a (2, 4, 16, 16) input.
    N, C, H, W = 2, 4, 16, 16
    n_classes = 3

    key = jax.random.PRNGKey(0)
    kx, kw, kb = jax.random.split(key, 3)
    x = jax.random.normal(kx, (N, C, H, W), jnp.float32)
    weight = 0.1 * jax.random.normal(kw, (C, n_classes, 1, 1), jnp.float32)
    bias = 0.1 * jax.random.normal(kb, (n_classes,), jnp.float32)

    out = jax.block_until_ready(out_block(x, weight, bias))

    ref = reference_forward(x, weight, bias)
    assert out.shape == (N, n_classes, H, W)
    assert jnp.allclose(out, ref, atol=1e-5, rtol=1e-5), float(jnp.abs(out - ref).max())

    print("KERNEL_OK")
</pallas_src>

<mosaic_0001>
module attributes {stable_mosaic.version = 11 : i64} {
  func.func @out_block_kernel(%arg0: memref<8x256xf32, #tpu.memory_space<vmem>>, %arg1: memref<12xf32, #tpu.memory_space<smem>>, %arg2: memref<3xf32, #tpu.memory_space<smem>>, %arg3: memref<6x256xf32, #tpu.memory_space<vmem>>) attributes {dimension_semantics = [], scalar_prefetch = 0 : i64, scratch_operands = 0 : i64, tpu.core_type = #tpu.core_type<tc>} {
    %c0 = arith.constant 0 : index
    %c0_0 = arith.constant 0 : index
    %0 = vector.load %arg0[%c0, %c0_0] : memref<8x256xf32, #tpu.memory_space<vmem>>, vector<1x256xf32>
    %c1 = arith.constant 1 : index
    %c0_1 = arith.constant 0 : index
    %1 = vector.load %arg0[%c1, %c0_1] : memref<8x256xf32, #tpu.memory_space<vmem>>, vector<1x256xf32>
    %c2 = arith.constant 2 : index
    %c0_2 = arith.constant 0 : index
    %2 = vector.load %arg0[%c2, %c0_2] : memref<8x256xf32, #tpu.memory_space<vmem>>, vector<1x256xf32>
    %c3 = arith.constant 3 : index
    %c0_3 = arith.constant 0 : index
    %3 = vector.load %arg0[%c3, %c0_3] : memref<8x256xf32, #tpu.memory_space<vmem>>, vector<1x256xf32>
    %c4 = arith.constant 4 : index
    %c0_4 = arith.constant 0 : index
    %4 = vector.load %arg0[%c4, %c0_4] : memref<8x256xf32, #tpu.memory_space<vmem>>, vector<1x256xf32>
    %c5 = arith.constant 5 : index
    %c0_5 = arith.constant 0 : index
    %5 = vector.load %arg0[%c5, %c0_5] : memref<8x256xf32, #tpu.memory_space<vmem>>, vector<1x256xf32>
    %c6 = arith.constant 6 : index
    %c0_6 = arith.constant 0 : index
    %6 = vector.load %arg0[%c6, %c0_6] : memref<8x256xf32, #tpu.memory_space<vmem>>, vector<1x256xf32>
    %c7 = arith.constant 7 : index
    %c0_7 = arith.constant 0 : index
    %7 = vector.load %arg0[%c7, %c0_7] : memref<8x256xf32, #tpu.memory_space<vmem>>, vector<1x256xf32>
    %c0_8 = arith.constant 0 : index
    %8 = memref.load %arg1[%c0_8] : memref<12xf32, #tpu.memory_space<smem>>
    %9 = vector.broadcast %8 : f32 to vector<1x256xf32>
    %10 = arith.mulf %0, %9 : vector<1x256xf32>
    %c0_9 = arith.constant 0 : index
    %11 = memref.load %arg2[%c0_9] : memref<3xf32, #tpu.memory_space<smem>>
    %12 = vector.broadcast %11 : f32 to vector<1x256xf32>
    %13 = arith.addf %10, %12 : vector<1x256xf32>
    %c3_10 = arith.constant 3 : index
    %14 = memref.load %arg1[%c3_10] : memref<12xf32, #tpu.memory_space<smem>>
    %15 = vector.broadcast %14 : f32 to vector<1x256xf32>
    %16 = arith.mulf %1, %15 : vector<1x256xf32>
    %17 = arith.addf %13, %16 : vector<1x256xf32>
    %c6_11 = arith.constant 6 : index
    %18 = memref.load %arg1[%c6_11] : memref<12xf32, #tpu.memory_space<smem>>
    %19 = vector.broadcast %18 : f32 to vector<1x256xf32>
    %20 = arith.mulf %2, %19 : vector<1x256xf32>
    %21 = arith.addf %17, %20 : vector<1x256xf32>
    %c9 = arith.constant 9 : index
    %22 = memref.load %arg1[%c9] : memref<12xf32, #tpu.memory_space<smem>>
    %23 = vector.broadcast %22 : f32 to vector<1x256xf32>
    %24 = arith.mulf %3, %23 : vector<1x256xf32>
    %25 = arith.addf %21, %24 : vector<1x256xf32>
    %c1_12 = arith.constant 1 : index
    %26 = memref.load %arg1[%c1_12] : memref<12xf32, #tpu.memory_space<smem>>
    %27 = vector.broadcast %26 : f32 to vector<1x256xf32>
    %28 = arith.mulf %0, %27 : vector<1x256xf32>
    %c1_13 = arith.constant 1 : index
    %29 = memref.load %arg2[%c1_13] : memref<3xf32, #tpu.memory_space<smem>>
    %30 = vector.broadcast %29 : f32 to vector<1x256xf32>
    %31 = arith.addf %28, %30 : vector<1x256xf32>
    %c4_14 = arith.constant 4 : index
    %32 = memref.load %arg1[%c4_14] : memref<12xf32, #tpu.memory_space<smem>>
    %33 = vector.broadcast %32 : f32 to vector<1x256xf32>
    %34 = arith.mulf %1, %33 : vector<1x256xf32>
    %35 = arith.addf %31, %34 : vector<1x256xf32>
    %c7_15 = arith.constant 7 : index
    %36 = memref.load %arg1[%c7_15] : memref<12xf32, #tpu.memory_space<smem>>
    %37 = vector.broadcast %36 : f32 to vector<1x256xf32>
    %38 = arith.mulf %2, %37 : vector<1x256xf32>
    %39 = arith.addf %35, %38 : vector<1x256xf32>
    %c10 = arith.constant 10 : index
    %40 = memref.load %arg1[%c10] : memref<12xf32, #tpu.memory_space<smem>>
    %41 = vector.broadcast %40 : f32 to vector<1x256xf32>
    %42 = arith.mulf %3, %41 : vector<1x256xf32>
    %43 = arith.addf %39, %42 : vector<1x256xf32>
    %c2_16 = arith.constant 2 : index
    %44 = memref.load %arg1[%c2_16] : memref<12xf32, #tpu.memory_space<smem>>
    %45 = vector.broadcast %44 : f32 to vector<1x256xf32>
    %46 = arith.mulf %0, %45 : vector<1x256xf32>
    %c2_17 = arith.constant 2 : index
    %47 = memref.load %arg2[%c2_17] : memref<3xf32, #tpu.memory_space<smem>>
    %48 = vector.broadcast %47 : f32 to vector<1x256xf32>
    %49 = arith.addf %46, %48 : vector<1x256xf32>
    %c5_18 = arith.constant 5 : index
    %50 = memref.load %arg1[%c5_18] : memref<12xf32, #tpu.memory_space<smem>>
    %51 = vector.broadcast %50 : f32 to vector<1x256xf32>
    %52 = arith.mulf %1, %51 : vector<1x256xf32>
    %53 = arith.addf %49, %52 : vector<1x256xf32>
    %c8 = arith.constant 8 : index
    %54 = memref.load %arg1[%c8] : memref<12xf32, #tpu.memory_space<smem>>
    %55 = vector.broadcast %54 : f32 to vector<1x256xf32>
    %56 = arith.mulf %2, %55 : vector<1x256xf32>
    %57 = arith.addf %53, %56 : vector<1x256xf32>
    %c11 = arith.constant 11 : index
    %58 = memref.load %arg1[%c11] : memref<12xf32, #tpu.memory_space<smem>>
    %59 = vector.broadcast %58 : f32 to vector<1x256xf32>
    %60 = arith.mulf %3, %59 : vector<1x256xf32>
    %61 = arith.addf %57, %60 : vector<1x256xf32>
    %c0_19 = arith.constant 0 : index
    %62 = memref.load %arg1[%c0_19] : memref<12xf32, #tpu.memory_space<smem>>
    %63 = vector.broadcast %62 : f32 to vector<1x256xf32>
    %64 = arith.mulf %4, %63 : vector<1x256xf32>
    %c0_20 = arith.constant 0 : index
    %65 = memref.load %arg2[%c0_20] : memref<3xf32, #tpu.memory_space<smem>>
    %66 = vector.broadcast %65 : f32 to vector<1x256xf32>
    %67 = arith.addf %64, %66 : vector<1x256xf32>
    %c3_21 = arith.constant 3 : index
    %68 = memref.load %arg1[%c3_21] : memref<12xf32, #tpu.memory_space<smem>>
    %69 = vector.broadcast %68 : f32 to vector<1x256xf32>
    %70 = arith.mulf %5, %69 : vector<1x256xf32>
    %71 = arith.addf %67, %70 : vector<1x256xf32>
    %c6_22 = arith.constant 6 : index
    %72 = memref.load %arg1[%c6_22] : memref<12xf32, #tpu.memory_space<smem>>
    %73 = vector.broadcast %72 : f32 to vector<1x256xf32>
    %74 = arith.mulf %6, %73 : vector<1x256xf32>
    %75 = arith.addf %71, %74 : vector<1x256xf32>
    %c9_23 = arith.constant 9 : index
    %76 = memref.load %arg1[%c9_23] : memref<12xf32, #tpu.memory_space<smem>>
    %77 = vector.broadcast %76 : f32 to vector<1x256xf32>
    %78 = arith.mulf %7, %77 : vector<1x256xf32>
    %79 = arith.addf %75, %78 : vector<1x256xf32>
    %c1_24 = arith.constant 1 : index
    %80 = memref.load %arg1[%c1_24] : memref<12xf32, #tpu.memory_space<smem>>
    %81 = vector.broadcast %80 : f32 to vector<1x256xf32>
    %82 = arith.mulf %4, %81 : vector<1x256xf32>
    %c1_25 = arith.constant 1 : index
    %83 = memref.load %arg2[%c1_25] : memref<3xf32, #tpu.memory_space<smem>>
    %84 = vector.broadcast %83 : f32 to vector<1x256xf32>
    %85 = arith.addf %82, %84 : vector<1x256xf32>
    %c4_26 = arith.constant 4 : index
    %86 = memref.load %arg1[%c4_26] : memref<12xf32, #tpu.memory_space<smem>>
    %87 = vector.broadcast %86 : f32 to vector<1x256xf32>
    %88 = arith.mulf %5, %87 : vector<1x256xf32>
    %89 = arith.addf %85, %88 : vector<1x256xf32>
    %c7_27 = arith.constant 7 : index
    %90 = memref.load %arg1[%c7_27] : memref<12xf32, #tpu.memory_space<smem>>
    %91 = vector.broadcast %90 : f32 to vector<1x256xf32>
    %92 = arith.mulf %6, %91 : vector<1x256xf32>
    %93 = arith.addf %89, %92 : vector<1x256xf32>
    %c10_28 = arith.constant 10 : index
    %94 = memref.load %arg1[%c10_28] : memref<12xf32, #tpu.memory_space<smem>>
    %95 = vector.broadcast %94 : f32 to vector<1x256xf32>
    %96 = arith.mulf %7, %95 : vector<1x256xf32>
    %97 = arith.addf %93, %96 : vector<1x256xf32>
    %c2_29 = arith.constant 2 : index
    %98 = memref.load %arg1[%c2_29] : memref<12xf32, #tpu.memory_space<smem>>
    %99 = vector.broadcast %98 : f32 to vector<1x256xf32>
    %100 = arith.mulf %4, %99 : vector<1x256xf32>
    %c2_30 = arith.constant 2 : index
    %101 = memref.load %arg2[%c2_30] : memref<3xf32, #tpu.memory_space<smem>>
    %102 = vector.broadcast %101 : f32 to vector<1x256xf32>
    %103 = arith.addf %100, %102 : vector<1x256xf32>
    %c5_31 = arith.constant 5 : index
    %104 = memref.load %arg1[%c5_31] : memref<12xf32, #tpu.memory_space<smem>>
    %105 = vector.broadcast %104 : f32 to vector<1x256xf32>
    %106 = arith.mulf %5, %105 : vector<1x256xf32>
    %107 = arith.addf %103, %106 : vector<1x256xf32>
    %c8_32 = arith.constant 8 : index
    %108 = memref.load %arg1[%c8_32] : memref<12xf32, #tpu.memory_space<smem>>
    %109 = vector.broadcast %108 : f32 to vector<1x256xf32>
    %110 = arith.mulf %6, %109 : vector<1x256xf32>
    %111 = arith.addf %107, %110 : vector<1x256xf32>
    %c11_33 = arith.constant 11 : index
    %112 = memref.load %arg1[%c11_33] : memref<12xf32, #tpu.memory_space<smem>>
    %113 = vector.broadcast %112 : f32 to vector<1x256xf32>
    %114 = arith.mulf %7, %113 : vector<1x256xf32>
    %115 = arith.addf %111, %114 : vector<1x256xf32>
    %116 = tpu.concatenate %25, %43, %61, %79, %97, %115 in 0 : vector<1x256xf32>, vector<1x256xf32>, vector<1x256xf32>, vector<1x256xf32>, vector<1x256xf32>, vector<1x256xf32> -> vector<6x256xf32>
    %c0_34 = arith.constant 0 : index
    %c0_35 = arith.constant 0 : index
    %117 = vector.load %arg3[%c0_34, %c0_35] : memref<6x256xf32, #tpu.memory_space<vmem>>, vector<6x256xf32>
    tpu.vector_store %arg3[%c0_34, %c0_35], %116 {strides = array<i32>} : memref<6x256xf32, #tpu.memory_space<vmem>>, vector<6x256xf32>,
    return
  }
}

</mosaic_0001>

<llo_original>
// kernel: tpu_custom_call.1
$region0: #{tpu_custom_call.1}
  #allocation0 [shape = 'u32[]', space=smem, size = 0x4, offset = 0x4, fixed_abs, tag = 'smem constant byte address 0x4 - core index']
  #allocation1 [shape = 'u32[144,128]{1,0:T(1,128)}', space=vmem, size = 0x12000, scoped, tag = 'internal scratch']
  %s0 = inlined_call_operand.hbm [shape: f32[8,256], index: 0, kind: input, shape index: {}]
  %s1 = inlined_call_operand.vmem [shape: f32[12], index: 1, kind: input, shape index: {}]
  %s2 = inlined_call_operand.vmem [shape: f32[3], index: 2, kind: input, shape index: {}]
  %s3 = inlined_call_operand.hbm [shape: f32[6,256], index: 3, kind: output, shape index: {}]
  %s4 = sld [smem:[#allocation0]]
  $region34: #{tpu_custom_call.1} parent=0
    _
  %s6 = ssub.s32 1, %s4
  %s7 = scalar_select 0, %s6, %s4
  $region1: #{tpu_custom_call.1} parent=0
    #allocation2 [shape = 'u8[8192]{0}', space=vmem, size = 0x2000, scoped, tag = 'input window, operand 0, single buffered']
    #allocation3 [shape = 's32[1]{0}', space=sflag, size = 0x4, scoped, tag = 'scoped memory for tpu_custom_call.1']
    #allocation4 [shape = 's32[1]{0}', space=sflag, size = 0x4, scoped, tag = 'scoped memory for tpu_custom_call.1']
    #allocation5 [shape = 's32[1]{0}', space=sflag, size = 0x4, scoped, tag = 'scoped memory for tpu_custom_call.1']
    #allocation6 [shape = 'u8[512]{0}', space=smem, size = 0x200, scoped, tag = 'input window, operand 1, single buffered']
    #allocation7 [shape = 'u8[512]{0}', space=smem, size = 0x200, scoped, tag = 'input window, operand 2, single buffered']
    #allocation8 [shape = 's32[1]{0}', space=sflag, size = 0x4, scoped, tag = 'scoped memory for tpu_custom_call.1']
    #allocation9 [shape = 'u8[8192]{0}', space=vmem, size = 0x2000, scoped, tag = 'output window, operand 0, single buffered']
    %8 = vsyncpa [#allocation3], 0
    %9 = vsyncpa [#allocation5], 0
    %10 = vsyncpa [#allocation8], 0
    %11 = vsyncpa [#allocation4], 0
    // Predicated region
    $region2: #{tpu_custom_call.1} parent=1 // pred_check
      _
    $region3: #{tpu_custom_call.1} parent=1 // pred_check_branch
      %13 = sbr.rel (0) target = $region5
    $region4: #{tpu_custom_call.1} parent=1 // pred_region
      %s15 = ssub.s32 256, 256
      %16 = vsyncadd [#allocation3], %s15
      %s18 = sshll.u32 [#allocation2], 4
      %s19 = int_to_ptr.vmem [resolvable:$true] %s18
      %21 = dma.hbm_to_vmem [thread:$0]  %s0, 256, %s19, [#allocation3]
    $region5: #{tpu_custom_call.1} parent=1 // pred_fallthru
      _
    // Predicated region
    $region6: #{tpu_custom_call.1} parent=1 // pred_check
      _
    $region7: #{tpu_custom_call.1} parent=1 // pred_check_branch
      %23 = sbr.rel (0) target = $region9
    $region8: #{tpu_custom_call.1} parent=1 // pred_region
      %s25 = ssub.s32 16, 16
      %26 = vsyncadd [#allocation5], %s25
      %s28 = sshll.u32 %s1, 4
      %s29 = int_to_ptr.vmem [resolvable:$true] %s28
      %31 = dma.vmem_to_smem %s29, 16, [#allocation6], [#allocation5]
    $region9: #{tpu_custom_call.1} parent=1 // pred_fallthru
      _
    // Predicated region
    $region10: #{tpu_custom_call.1} parent=1 // pred_check
      _
    $region11: #{tpu_custom_call.1} parent=1 // pred_check_branch
      %33 = sbr.rel (0) target = $region13
    $region12: #{tpu_custom_call.1} parent=1 // pred_region
      %s35 = ssub.s32 16, 16
      %36 = vsyncadd [#allocation8], %s35
      %s38 = sshll.u32 %s2, 4
      %s39 = int_to_ptr.vmem [resolvable:$true] %s38
      %41 = dma.vmem_to_smem %s39, 16, [#allocation7], [#allocation8]
    $region13: #{tpu_custom_call.1} parent=1 // pred_fallthru
      _
    // Predicated region
    $region14: #{tpu_custom_call.1} parent=1 // pred_check
      _
    $region15: #{tpu_custom_call.1} parent=1 // pred_check_branch
      %43 = sbr.rel (0) target = $region17
    $region16: #{tpu_custom_call.1} parent=1 // pred_region
      %44 = dma.done [#allocation3], 256
    $region17: #{tpu_custom_call.1} parent=1 // pred_fallthru
      _
    // Predicated region
    $region18: #{tpu_custom_call.1} parent=1 // pred_check
      _
    $region19: #{tpu_custom_call.1} parent=1 // pred_check_branch
      %46 = sbr.rel (0) target = $region21
    $region20: #{tpu_custom_call.1} parent=1 // pred_region
      %47 = dma.done [#allocation5], 16
    $region21: #{tpu_custom_call.1} parent=1 // pred_fallthru
      _
    // Predicated region
    $region22: #{tpu_custom_call.1} parent=1 // pred_check
      _
    $region23: #{tpu_custom_call.1} parent=1 // pred_check_branch
      %49 = sbr.rel (0) target = $region25
    $region24: #{tpu_custom_call.1} parent=1 // pred_region
      %50 = dma.done [#allocation8], 16
    $region25: #{tpu_custom_call.1} parent=1 // pred_fallthru
      _
    %51 = sfence
    %v52 = vld [vmem:[#allocation2] ss:$8 sm:$0x3]
    %s53 = scalar_lea.vmem [#allocation2], 1
    %v54 = vld [vmem:[%s53] ss:$8 sm:$0x3]
    %s55 = scalar_lea.vmem [#allocation2], 2
    %v56 = vld [vmem:[%s55] ss:$8 sm:$0x3]
    %s57 = scalar_lea.vmem [#allocation2], 3
    %v58 = vld [vmem:[%s57] ss:$8 sm:$0x3]
    %s59 = scalar_lea.vmem [#allocation2], 4
    %v60 = vld [vmem:[%s59] ss:$8 sm:$0x3]
    %s61 = scalar_lea.vmem [#allocation2], 5
    %v62 = vld [vmem:[%s61] ss:$8 sm:$0x3]
    %s63 = scalar_lea.vmem [#allocation2], 6
    %v64 = vld [vmem:[%s63] ss:$8 sm:$0x3]
    %s65 = scalar_lea.vmem [#allocation2], 7
    %v66 = vld [vmem:[%s65] ss:$8 sm:$0x3]
    %s67 = sld [smem:[#allocation6]]
    %v68 = vstv %s67
    %v69 = vmul.f32 %v52, %v68
    %s70 = sld [smem:[#allocation7]]
    %v71 = vstv %s70
    %v72 = vadd.f32 %v69, %v71
    %s73 = sld [smem:[#allocation6 + $0x3]]
    %v74 = vstv %s73
    %v75 = vmul.f32 %v54, %v74
    %v76 = vadd.f32 %v72, %v75
    %s77 = sld [smem:[#allocation6 + $0x6]]
    %v78 = vstv %s77
    %v79 = vmul.f32 %v56, %v78
    %v80 = vadd.f32 %v76, %v79
    %s81 = sld [smem:[#allocation6 + $0x9]]
    %v82 = vstv %s81
    %v83 = vmul.f32 %v58, %v82
    %v84 = vadd.f32 %v80, %v83
    %s85 = sld [smem:[#allocation6 + $0x1]]
    %v86 = vstv %s85
    %v87 = vmul.f32 %v52, %v86
    %s88 = sld [smem:[#allocation7 + $0x1]]
    %v89 = vstv %s88
    %v90 = vadd.f32 %v87, %v89
    %s91 = sld [smem:[#allocation6 + $0x4]]
    %v92 = vstv %s91
    %v93 = vmul.f32 %v54, %v92
    %v94 = vadd.f32 %v90, %v93
    %s95 = sld [smem:[#allocation6 + $0x7]]
    %v96 = vstv %s95
    %v97 = vmul.f32 %v56, %v96
    %v98 = vadd.f32 %v94, %v97
    %s99 = sld [smem:[#allocation6 + $0xa]]
    %v100 = vstv %s99
    %v101 = vmul.f32 %v58, %v100
    %v102 = vadd.f32 %v98, %v101
    %s103 = sld [smem:[#allocation6 + $0x2]]
    %v104 = vstv %s103
    %v105 = vmul.f32 %v52, %v104
    %s106 = sld [smem:[#allocation7 + $0x2]]
    %v107 = vstv %s106
    %v108 = vadd.f32 %v105, %v107
    %s109 = sld [smem:[#allocation6 + $0x5]]
    %v110 = vstv %s109
    %v111 = vmul.f32 %v54, %v110
    %v112 = vadd.f32 %v108, %v111
    %s113 = sld [smem:[#allocation6 + $0x8]]
    %v114 = vstv %s113
    %v115 = vmul.f32 %v56, %v114
    %v116 = vadd.f32 %v112, %v115
    %s117 = sld [smem:[#allocation6 + $0xb]]
    %v118 = vstv %s117
    %v119 = vmul.f32 %v58, %v118
    %v120 = vadd.f32 %v116, %v119
    %v121 = vmul.f32 %v60, %v68
    %v122 = vadd.f32 %v121, %v71
    %v123 = vmul.f32 %v62, %v74
    %v124 = vadd.f32 %v122, %v123
    %v125 = vmul.f32 %v64, %v78
    %v126 = vadd.f32 %v124, %v125
    %v127 = vmul.f32 %v66, %v82
    %v128 = vadd.f32 %v126, %v127
    %v129 = vmul.f32 %v60, %v86
    %v130 = vadd.f32 %v129, %v89
    %v131 = vmul.f32 %v62, %v92
    %v132 = vadd.f32 %v130, %v131
    %v133 = vmul.f32 %v64, %v96
    %v134 = vadd.f32 %v132, %v133
    %v135 = vmul.f32 %v66, %v100
    %v136 = vadd.f32 %v134, %v135
    %v137 = vmul.f32 %v60, %v104
    %v138 = vadd.f32 %v137, %v107
    %v139 = vmul.f32 %v62, %v110
    %v140 = vadd.f32 %v138, %v139
    %v141 = vmul.f32 %v64, %v114
    %v142 = vadd.f32 %v140, %v141
    %v143 = vmul.f32 %v66, %v118
    %v144 = vadd.f32 %v142, %v143
    %v146 = vlaneseq
    %v147 = vshrl.u32 %v146, 7
    %v148 = vsub.s32 0, %v147
    %v149 = vrot.slane %v84, %v148
    %v150 = vlaneseq
    %v151 = vshrl.u32 %v150, 7
    %v152 = vsub.s32 1, %v151
    %v153 = vrot.slane %v84, %v152
    %v157 = vlaneseq
    %v158 = vshrl.u32 %v157, 7
    %v159 = vsub.s32 0, %v158
    %v160 = vrot.slane %v102, %v159
    %v161 = vlaneseq
    %v162 = vshrl.u32 %v161, 7
    %v163 = vsub.s32 1, %v162
    %v164 = vrot.slane %v102, %v163
    %v168 = vlaneseq
    %v169 = vshrl.u32 %v168, 7
    %v170 = vsub.s32 0, %v169
    %v171 = vrot.slane %v120, %v170
    %v172 = vlaneseq
    %v173 = vshrl.u32 %v172, 7
    %v174 = vsub.s32 1, %v173
    %v175 = vrot.slane %v120, %v174
    %v179 = vlaneseq
    %v180 = vshrl.u32 %v179, 7
    %v181 = vsub.s32 0, %v180
    %v182 = vrot.slane %v128, %v181
    %v183 = vlaneseq
    %v184 = vshrl.u32 %v183, 7
    %v185 = vsub.s32 1, %v184
    %v186 = vrot.slane %v128, %v185
    %v190 = vlaneseq
    %v191 = vshrl.u32 %v190, 7
    %v192 = vsub.s32 0, %v191
    %v193 = vrot.slane %v136, %v192
    %v194 = vlaneseq
    %v195 = vshrl.u32 %v194, 7
    %v196 = vsub.s32 1, %v195
    %v197 = vrot.slane %v136, %v196
    %v201 = vlaneseq
    %v202 = vshrl.u32 %v201, 7
    %v203 = vsub.s32 0, %v202
    %v204 = vrot.slane %v144, %v203
    %v205 = vlaneseq
    %v206 = vshrl.u32 %v205, 7
    %v207 = vsub.s32 1, %v206
    %v208 = vrot.slane %v144, %v207
    %vm211 = vcmask 1040384
    %v212 = vsel %vm211, %v149, %v160
    %v213 = vsel %vm211, %v153, %v164
    %vm214 = vcmask 1041408
    %v215 = vsel %vm214, %v212, %v171
    %v216 = vsel %vm214, %v213, %v175
    %vm217 = vcmask 1042432
    %v218 = vsel %vm217, %v215, %v182
    %v219 = vsel %vm217, %v216, %v186
    %vm220 = vcmask 1043456
    %v221 = vsel %vm220, %v218, %v193
    %v222 = vsel %vm220, %v219, %v197
    %vm223 = vcmask 1044480
    %v224 = vsel %vm223, %v221, %v204
    %v225 = vsel %vm223, %v222, %v208
    %226 = vst [vmem:[#allocation9] sm:$0x3f] %v224
    %227 = vst [vmem:[#allocation9 + $0x8] sm:$0x3f] %v225
    // Predicated region
    $region26: #{tpu_custom_call.1} parent=1 // pred_check
      _
    $region27: #{tpu_custom_call.1} parent=1 // pred_check_branch
      %229 = sbr.rel (0) target = $region29
    $region28: #{tpu_custom_call.1} parent=1 // pred_region
      %s231 = ssub.s32 256, 256
      %232 = vsyncadd [#allocation4], %s231
      %s234 = sshll.u32 [#allocation9], 4
      %s235 = int_to_ptr.vmem [resolvable:$true] %s234
      %237 = dma.vmem_to_hbm [thread:$0]  %s235, 256, %s3, [#allocation4]
    $region29: #{tpu_custom_call.1} parent=1 // pred_fallthru
      _
    // Predicated region
    $region30: #{tpu_custom_call.1} parent=1 // pred_check
      _
    $region31: #{tpu_custom_call.1} parent=1 // pred_check_branch
      %239 = sbr.rel (0) target = $region33
    $region32: #{tpu_custom_call.1} parent=1 // pred_region
      %240 = dma.done [#allocation4], 256
    $region33: #{tpu_custom_call.1} parent=1 // pred_fallthru
      _
    %241 = vsyncpa [#allocation3], 1
    %242 = vsyncpa [#allocation4], 1
    %243 = vsyncpa [#allocation5], 1
    %244 = vsyncpa [#allocation8], 1

</llo_original>
